<compile_context>
chip_gen: v6e
topology: v6e:2x2x1
jax: 0.10.0
libtpu: 0.0.40
codegen_flags: <defaults>
</compile_context>

<pallas_src>
import functools

import jax
import jax.numpy as jnp
import numpy as np
from jax.experimental import pallas as pl
from jax.experimental.pallas import tpu as pltpu


def _instance_norm_kernel(x_ref, wb_ref, o_ref, *, eps, inv_s):
    """Instance-norm + affine on one (row-tile, full-spatial) block.

    x_ref : (tr, S_pad)  features, one row per (sample, channel) instance
    wb_ref: (tr, 2)      column 0 = weight, column 1 = bias (f32)
    o_ref : (tr, S_pad)  output
    """
    x = x_ref[...].astype(jnp.float32)                       # (tr, S_pad)
    # One accumulation pass: raw moments (safe with zero-padded lanes).
    s1 = jnp.sum(x, axis=-1, keepdims=True)                  # (tr, 1)
    s2 = jnp.sum(x * x, axis=-1, keepdims=True)              # (tr, 1)
    mean = s1 * inv_s
    var = jnp.maximum(s2 * inv_s - mean * mean, 0.0)
    w = wb_ref[:, 0:1]
    b = wb_ref[:, 1:2]
    # Fold the affine weight into the normalization scale (rsqrt -> EUP).
    scale = jax.lax.rsqrt(var + eps) * w                     # (tr, 1)
    o_ref[...] = ((x - mean) * scale + b).astype(o_ref.dtype)


def _vmem_capacity_bytes():
    try:
        return int(pltpu.get_tpu_info().vmem_capacity_bytes)
    except Exception:
        return 64 * 1024 * 1024   # conservative (v7x per-TC) fallback


def _sublane_quantum(itemsize):
    return {4: 8, 2: 16, 1: 32}.get(itemsize, 8)


def _pipeline_footprint(tr, s_pad, in_item, out_item):
    """Approx. total VMEM bytes: double-buffered in/out blocks + f32 temps + wb."""
    blk = tr * s_pad
    return blk * (2 * in_item + 2 * out_item + 2 * 4) + 2 * tr * 2 * 4


def _choose_row_tile(num_rows, s_pad, in_item, out_item, vmem_cap):
    sub = _sublane_quantum(in_item)
    per_row = _pipeline_footprint(1, s_pad, in_item, out_item)
    budget = min(vmem_cap // 2, 24 * 1024 * 1024)
    # Streaming blocks beyond ~1-2 MiB don't buy HBM bandwidth; cap them.
    max_rows_by_block = max(1, (2 * 1024 * 1024) // max(1, s_pad * in_item))
    max_rows_by_budget = max(1, budget // per_row)
    max_rows = min(max_rows_by_block, max_rows_by_budget)
    if num_rows <= max(max_rows, sub):
        return num_rows            # single (or full-dim) block — tiny-tensor path
    tr = (max_rows // sub) * sub
    tr = max(tr, sub)              # may slightly exceed budget for huge S
    # TODO(synk): for very large instances (S so big that even tr=sub + temps
    # exceed the VMEM budget, e.g. S >~ 1-2M on v7x), add a two-pass fallback
    # that splits S over an "arbitrary" grid axis (accumulate stats, then
    # re-read and normalize).
    return min(tr, num_rows)


def instance_norm_pallas(x, weight, bias, *, eps=1e-8, tr=None):
    """x: [N, C, D, H, W]; weight/bias broadcastable to [N, C, 1, 1, 1]."""
    N, C, D, H, W = x.shape
    S = D * H * W
    R = N * C
    S_pad = ((S + 127) // 128) * 128

    x2 = x.reshape(R, S)
    if S_pad != S:
        x2 = jnp.pad(x2, ((0, 0), (0, S_pad - S)))   # zeros: transparent to raw moments

    w = jnp.broadcast_to(jnp.asarray(weight, jnp.float32),
                         (N, C, 1, 1, 1)).reshape(R, 1)
    b = jnp.broadcast_to(jnp.asarray(bias, jnp.float32),
                         (N, C, 1, 1, 1)).reshape(R, 1)
    wb = jnp.concatenate([w, b], axis=-1)            # (R, 2): one tiny DMA per step

    in_item = x.dtype.itemsize
    out_item = in_item
    vmem_cap = _vmem_capacity_bytes()

    if tr is None:
        tr = _choose_row_tile(R, S_pad, in_item, out_item, vmem_cap)
    else:
        sub = _sublane_quantum(in_item)
        tr = min(tr, R)
        if tr != R and tr % sub != 0:
            tr = max(sub, (tr // sub) * sub)

    footprint = _pipeline_footprint(tr, S_pad, in_item, out_item)
    vmem_limit = int(min(int(vmem_cap * 0.9),
                         max(16 * 1024 * 1024, int(footprint * 1.5))))

    kernel = functools.partial(_instance_norm_kernel, eps=float(eps), inv_s=1.0 / S)

    num_steps = pl.cdiv(R, tr)
    out = pl.pallas_call(
        kernel,
        out_shape=jax.ShapeDtypeStruct((R, S_pad), x.dtype),
        grid_spec=pltpu.PrefetchScalarGridSpec(
            num_scalar_prefetch=0,
            grid=(num_steps,),
            in_specs=[
                pl.BlockSpec((tr, S_pad), lambda r: (r, 0)),
                pl.BlockSpec((tr, 2), lambda r: (r, 0)),
            ],
            out_specs=pl.BlockSpec((tr, S_pad), lambda r: (r, 0)),
        ),
        compiler_params=pltpu.CompilerParams(
            dimension_semantics=("parallel",),
            vmem_limit_bytes=vmem_limit),
    )(x2, wb)

    if S_pad != S:
        out = out[:, :S]
    return out.reshape(N, C, D, H, W)


def instance_norm_layer_forward(x, weight=None, bias=None, *, eps=1e-8,
                                affine=False, affine_weight=None,
                                affine_bias=None, tr=None):
    """Mirrors InstanceNormLayer.forward, including the affine/external-weight gate."""
    isnot_input_none = weight is not None and bias is not None
    assert (isnot_input_none and (not affine)) or ((not isnot_input_none) and affine)
    if affine:
        w, b = affine_weight, affine_bias
    else:
        w, b = weight, bias
    return instance_norm_pallas(x, w, b, eps=eps, tr=tr)


def instance_norm_reference(x, weight, bias, eps=1e-8):
    """Pure-JAX reference of the same semantics (for verification)."""
    xc = x - jnp.mean(x, axis=(2, 3, 4), keepdims=True)
    norm = jnp.sqrt(jnp.mean(xc ** 2, axis=(2, 3, 4), keepdims=True) + eps)
    return xc / norm * weight + bias


if __name__ == "__main__":
    eps = 1e-8
    key = jax.random.PRNGKey(0)
    k1, k2, k3, k4, k5 = jax.random.split(key, 5)

    # --- Case 1: lane-aligned spatial extent (S = 256), both affine paths.
    N, C, D, H, W = 2, 4, 4, 8, 8
    x = jax.random.normal(k1, (N, C, D, H, W), jnp.float32)

    w_ext = jax.random.normal(k2, (N, C, 1, 1, 1), jnp.float32)
    b_ext = jax.random.normal(k3, (N, C, 1, 1, 1), jnp.float32)
    out_ext = instance_norm_layer_forward(x, weight=w_ext, bias=b_ext,
                                          eps=eps, affine=False)

    w_aff = jax.random.uniform(k4, (1, C, 1, 1, 1), jnp.float32)
    b_aff = jnp.zeros((1, C, 1, 1, 1), jnp.float32)
    out_aff = instance_norm_layer_forward(x, eps=eps, affine=True,
                                          affine_weight=w_aff, affine_bias=b_aff)

    # --- Case 2: non-128-multiple spatial extent (S = 3*5*7 = 105) -> padding path.
    N2, C2, D2, H2, W2 = 2, 3, 3, 5, 7
    x2 = jax.random.normal(k5, (N2, C2, D2, H2, W2), jnp.float32)
    w2 = jax.random.normal(k2, (N2, C2, 1, 1, 1), jnp.float32)
    b2 = jax.random.normal(k3, (N2, C2, 1, 1, 1), jnp.float32)
    out2 = instance_norm_layer_forward(x2, weight=w2, bias=b2, eps=eps, affine=False)

    out_ext, out_aff, out2 = jax.block_until_ready((out_ext, out_aff, out2))

    assert out_ext.shape == (N, C, D, H, W)
    assert out_aff.shape == (N, C, D, H, W)
    assert out2.shape == (N2, C2, D2, H2, W2)

    np.testing.assert_allclose(np.asarray(out_ext),
                               np.asarray(instance_norm_reference(x, w_ext, b_ext, eps)),
                               rtol=1e-5, atol=1e-5)
    np.testing.assert_allclose(np.asarray(out_aff),
                               np.asarray(instance_norm_reference(x, w_aff, b_aff, eps)),
                               rtol=1e-5, atol=1e-5)
    np.testing.assert_allclose(np.asarray(out2),
                               np.asarray(instance_norm_reference(x2, w2, b2, eps)),
                               rtol=1e-5, atol=1e-5)

    print("KERNEL_OK")
</pallas_src>

<mosaic_0001>
module attributes {stable_mosaic.version = 11 : i64} {
  func.func @_instance_norm_kernel(%arg0: i32, %arg1: memref<8x256xf32, #tpu.memory_space<vmem>>, %arg2: memref<8x2xf32, #tpu.memory_space<vmem>>, %arg3: memref<8x256xf32, #tpu.memory_space<vmem>>) attributes {dimension_semantics = [#tpu.dimension_semantics<parallel>], iteration_bounds = array<i64: 1>, scalar_prefetch = 0 : i64, scratch_operands = 0 : i64, tpu.core_type = #tpu.core_type<tc>, window_params = [{transform_indices = @transform_0, window_bounds = array<i64: 8, 256>}, {transform_indices = @transform_1, window_bounds = array<i64: 8, 2>}, {transform_indices = @transform_2, window_bounds = array<i64: 8, 256>}]} {
    %c0 = arith.constant 0 : index
    %c0_0 = arith.constant 0 : index
    %0 = vector.load %arg1[%c0, %c0_0] : memref<8x256xf32, #tpu.memory_space<vmem>>, vector<8x256xf32>
    %cst = arith.constant dense<0.000000e+00> : vector<8xf32>
    %1 = vector.multi_reduction <add>, %0, %cst [1] : vector<8x256xf32> to vector<8xf32>
    %2 = vector.shape_cast %1 : vector<8xf32> to vector<8x1xf32>
    %3 = arith.mulf %0, %0 : vector<8x256xf32>
    %cst_1 = arith.constant dense<0.000000e+00> : vector<8xf32>
    %4 = vector.multi_reduction <add>, %3, %cst_1 [1] : vector<8x256xf32> to vector<8xf32>
    %5 = vector.shape_cast %4 : vector<8xf32> to vector<8x1xf32>
    %cst_2 = arith.constant 3.906250e-03 : f32
    %6 = vector.broadcast %cst_2 : f32 to vector<8x1xf32>
    %7 = arith.mulf %2, %6 : vector<8x1xf32>
    %cst_3 = arith.constant 3.906250e-03 : f32
    %8 = vector.broadcast %cst_3 : f32 to vector<8x1xf32>
    %9 = arith.mulf %5, %8 : vector<8x1xf32>
    %10 = arith.mulf %7, %7 : vector<8x1xf32>
    %11 = arith.subf %9, %10 : vector<8x1xf32>
    %cst_4 = arith.constant 0.000000e+00 : f32
    %12 = vector.broadcast %cst_4 : f32 to vector<8x1xf32>
    %13 = arith.maximumf %11, %12 : vector<8x1xf32>
    %c0_5 = arith.constant 0 : index
    %c0_6 = arith.constant 0 : index
    %14 = vector.load %arg2[%c0_5, %c0_6] : memref<8x2xf32, #tpu.memory_space<vmem>>, vector<8x1xf32>
    %c0_7 = arith.constant 0 : index
    %c1 = arith.constant 1 : index
    %15 = vector.load %arg2[%c0_7, %c1] : memref<8x2xf32, #tpu.memory_space<vmem>>, vector<8x1xf32>
    %cst_8 = arith.constant 9.99999993E-9 : f32
    %16 = vector.broadcast %cst_8 : f32 to vector<8x1xf32>
    %17 = arith.addf %13, %16 : vector<8x1xf32>
    %18 = math.rsqrt %17 : vector<8x1xf32>
    %19 = arith.mulf %18, %14 : vector<8x1xf32>
    %20 = vector.broadcast %7 : vector<8x1xf32> to vector<8x256xf32>
    %21 = arith.subf %0, %20 : vector<8x256xf32>
    %22 = vector.broadcast %19 : vector<8x1xf32> to vector<8x256xf32>
    %23 = arith.mulf %21, %22 : vector<8x256xf32>
    %24 = vector.broadcast %15 : vector<8x1xf32> to vector<8x256xf32>
    %25 = arith.addf %23, %24 : vector<8x256xf32>
    %c0_9 = arith.constant 0 : index
    %c0_10 = arith.constant 0 : index
    %26 = vector.load %arg3[%c0_9, %c0_10] : memref<8x256xf32, #tpu.memory_space<vmem>>, vector<8x256xf32>
    tpu.vector_store %arg3[%c0_9, %c0_10], %25 {strides = array<i32>} : memref<8x256xf32, #tpu.memory_space<vmem>>, vector<8x256xf32>,
    return
  }
  func.func @transform_0(%arg0: i32) -> (i32, i32) {
    %c0_i32 = arith.constant 0 : i32
    %c0_i32_0 = arith.constant 0 : i32
    return %arg0, %c0_i32 : i32, i32
  }
  func.func @transform_1(%arg0: i32) -> (i32, i32) {
    %c0_i32 = arith.constant 0 : i32
    %c0_i32_0 = arith.constant 0 : i32
    return %arg0, %c0_i32 : i32, i32
  }
  func.func @transform_2(%arg0: i32) -> (i32, i32) {
    %c0_i32 = arith.constant 0 : i32
    %c0_i32_0 = arith.constant 0 : i32
    return %arg0, %c0_i32 : i32, i32
  }
}

</mosaic_0001>

<llo_original>
// kernel: tpu_custom_call.1
$region0: #{tpu_custom_call.1}
  #allocation0 [shape = 'u32[]', space=smem, size = 0x4, offset = 0x4, fixed_abs, tag = 'smem constant byte address 0x4 - core index']
  #allocation1 [shape = 'u32[144,128]{1,0:T(1,128)}', space=vmem, size = 0x12000, scoped, tag = 'internal scratch']
  %s0 = inlined_call_operand.hbm [shape: f32[8,256], index: 0, kind: input, shape index: {}]
  %s1 = inlined_call_operand.vmem [shape: f32[8,2], index: 1, kind: input, shape index: {}]
  %s2 = inlined_call_operand.hbm [shape: f32[8,256], index: 2, kind: output, shape index: {}]
  %s3 = sld [smem:[#allocation0]]
  $region22: #{tpu_custom_call.1} parent=0
    _
  %s5 = ssub.s32 1, %s3
  %s6 = scalar_select 0, %s5, %s3
  $region1: #{tpu_custom_call.1} parent=0
    #allocation2 [shape = 'u8[8192]{0}', space=vmem, size = 0x2000, scoped, tag = 'input window, operand 0, single buffered']
    #allocation3 [shape = 's32[1]{0}', space=sflag, size = 0x4, scoped, tag = 'scoped memory for tpu_custom_call.1']
    #allocation4 [shape = 's32[1]{0}', space=sflag, size = 0x4, scoped, tag = 'scoped memory for tpu_custom_call.1']
    #allocation5 [shape = 'u8[8192]{0}', space=vmem, size = 0x2000, scoped, tag = 'output window, operand 0, single buffered']
    %7 = vsyncpa [#allocation3], 0
    %8 = vsyncpa [#allocation4], 0
    // Predicated region
    $region2: #{tpu_custom_call.1} parent=1 // pred_check
      _
    $region3: #{tpu_custom_call.1} parent=1 // pred_check_branch
      %10 = sbr.rel (0) target = $region5
    $region4: #{tpu_custom_call.1} parent=1 // pred_region
      %s12 = ssub.s32 256, 256
      %13 = vsyncadd [#allocation3], %s12
      %s15 = sshll.u32 [#allocation2], 4
      %s16 = int_to_ptr.vmem [resolvable:$true] %s15
      %18 = dma.hbm_to_vmem [thread:$0]  %s0, 256, %s16, [#allocation3]
    $region5: #{tpu_custom_call.1} parent=1 // pred_fallthru
      _
    // Predicated region
    $region6: #{tpu_custom_call.1} parent=1 // pred_check
      _
    $region7: #{tpu_custom_call.1} parent=1 // pred_check_branch
      %20 = sbr.rel (0) target = $region9
    $region8: #{tpu_custom_call.1} parent=1 // pred_region
      _
    $region9: #{tpu_custom_call.1} parent=1 // pred_fallthru
      _
    // Predicated region
    $region10: #{tpu_custom_call.1} parent=1 // pred_check
      _
    $region11: #{tpu_custom_call.1} parent=1 // pred_check_branch
      %22 = sbr.rel (0) target = $region13
    $region12: #{tpu_custom_call.1} parent=1 // pred_region
      %23 = dma.done [#allocation3], 256
    $region13: #{tpu_custom_call.1} parent=1 // pred_fallthru
      _
    %v24 = vld [vmem:[#allocation2] sm:$0xff]
    %v25 = vld [vmem:[#allocation2 + $0x8] sm:$0xff]
    %v26 = vadd.f32 %v24, %v25
    %27 = vadd.xlane.f32.xlu0 %v26
    %v28 = vpop.xlane.xlu0 %27
    %v29 = vmul.f32 %v24, %v24
    %v30 = vmul.f32 %v25, %v25
    %v31 = vadd.f32 %v29, %v30
    %32 = vadd.xlane.f32.xlu0 %v31
    %v33 = vpop.xlane.xlu0 %32
    %v34 = vmul.f32 %v28, 0.00390625
    %v35 = vmul.f32 %v33, 0.00390625
    %v36 = vmul.f32 %v34, %v34
    %v37 = vsub.f32 %v35, %v36
    %v38 = vmax.f32 %v37, 0.0
    %v39 = vld [vmem:[%s1] sm:$0xff]
    %v40 = vadd.f32 %v38, 1e-08
    %v41 = vrsqrt.pop %v40
    %v42 = vmul.f32 %v41, %v39
    %v43 = vsub.f32 %v24, %v34
    %v44 = vsub.f32 %v25, %v34
    %46 = vset.pattern.permute.xlu0 0
    %47 = vperm.xlu0 %46, %v42
    %v48 = vpop.permute.xlu0 %47
    %v50 = vmul.f32 %v43, %v48
    %v51 = vmul.f32 %v44, %v48
    %53 = vset.pattern.permute.xlu0 1
    %54 = vperm.xlu0 %53, %v39
    %v55 = vpop.permute.xlu0 %54
    %v57 = vadd.f32 %v50, %v55
    %v58 = vadd.f32 %v51, %v55
    %59 = vst [vmem:[#allocation5] sm:$0xff] %v57
    %60 = vst [vmem:[#allocation5 + $0x8] sm:$0xff] %v58
    // Predicated region
    $region14: #{tpu_custom_call.1} parent=1 // pred_check
      _
    $region15: #{tpu_custom_call.1} parent=1 // pred_check_branch
      %62 = sbr.rel (0) target = $region17
    $region16: #{tpu_custom_call.1} parent=1 // pred_region
      %s64 = ssub.s32 256, 256
      %65 = vsyncadd [#allocation4], %s64
      %s67 = sshll.u32 [#allocation5], 4
      %s68 = int_to_ptr.vmem [resolvable:$true] %s67
      %70 = dma.vmem_to_hbm [thread:$0]  %s68, 256, %s2, [#allocation4]
    $region17: #{tpu_custom_call.1} parent=1 // pred_fallthru
      _
    // Predicated region
    $region18: #{tpu_custom_call.1} parent=1 // pred_check
      _
    $region19: #{tpu_custom_call.1} parent=1 // pred_check_branch
      %72 = sbr.rel (0) target = $region21
    $region20: #{tpu_custom_call.1} parent=1 // pred_region
      %73 = dma.done [#allocation4], 256
    $region21: #{tpu_custom_call.1} parent=1 // pred_fallthru
      _
    %74 = vsyncpa [#allocation3], 1
    %75 = vsyncpa [#allocation4], 1

</llo_original>
